<compile_context>
chip_gen: v7x
topology: tpu7x:2x2x1
jax: 0.10.0
libtpu: 0.0.40
codegen_flags: <defaults>
</compile_context>

<pallas_src>
import jax
import jax.numpy as jnp
from jax.experimental import pallas as pl
from jax.experimental.pallas import tpu as pltpu


def _round_up(n, m):
    return ((n + m - 1) // m) * m


# ----------------------------------------------------------------------------- kernels
def _moe_kernel_selector(x_ref, w_ref, b_ref, r_ref, s_ref, o_ref):
    """Expert reduction via a block-diagonal 0/1 selector matmul.

    Used when C is NOT a multiple of 128 (the matmul also pads the output to a
    lane-dense C_pad width for unmasked stores).
      x_ref : [TB, D]          batch tile
      w_ref : [D,  E*C + E]    concat(expert_w flat, gate_w)  (experts first, gate at tail)
      b_ref : [1,  E*C + E]    concat biases (f32)
      r_ref : [E,  E*C]        gate "repeat" selector  (R[e, e*C + c] = 1)
      s_ref : [E*C, C_pad]     expert-sum selector     (S[e*C + c, c'] = delta(c, c'))
      o_ref : [TB, C_pad]
    """
    n_experts, ec = r_ref.shape

    x = x_ref[...]
    # One lane-dense MXU pass: all expert outputs + gate logits.
    y = jnp.dot(x, w_ref[...], preferred_element_type=jnp.float32) + b_ref[...]

    # Softmax over experts (EXACT reciprocal: gate weights must sum to 1).
    logits = y[:, ec:ec + n_experts]
    m = jnp.max(logits, axis=-1, keepdims=True)
    p = jnp.exp(logits - m)
    gate = p * pl.reciprocal(jnp.sum(p, axis=-1, keepdims=True), approx=False)   # [TB, E]

    # Expert slab starts at lane 0 -> free 128-aligned static slice.
    expert_flat = y[:, :ec]                                                       # [TB, E*C]

    # Broadcast each gate weight across its expert's C lanes with a tiny matmul
    # (avoids per-expert cross-lane extracts / broadcasts).
    gate_rep = jnp.dot(gate.astype(r_ref.dtype), r_ref[...],
                       preferred_element_type=jnp.float32)                        # [TB, E*C]
    gated = expert_flat * gate_rep

    # Weighted sum over experts + pad to C_pad lanes in one matmul.
    out = jnp.dot(gated.astype(s_ref.dtype), s_ref[...],
                  preferred_element_type=jnp.float32)                             # [TB, C_pad]
    o_ref[...] = out.astype(o_ref.dtype)


def _moe_kernel_sum(x_ref, w_ref, b_ref, r_ref, o_ref):
    """Expert reduction via E lane-dense adds over 128-aligned static slices.

    Used when C IS a multiple of 128 (production path): drops the E*C x C selector
    operand entirely (E*C*C elements would not fit any VMEM at real sizes).
    """
    n_experts, ec = r_ref.shape
    n_classes = o_ref.shape[1]

    x = x_ref[...]
    y = jnp.dot(x, w_ref[...], preferred_element_type=jnp.float32) + b_ref[...]

    logits = y[:, ec:ec + n_experts]
    m = jnp.max(logits, axis=-1, keepdims=True)
    p = jnp.exp(logits - m)
    gate = p * pl.reciprocal(jnp.sum(p, axis=-1, keepdims=True), approx=False)

    expert_flat = y[:, :ec]
    gate_rep = jnp.dot(gate.astype(r_ref.dtype), r_ref[...],
                       preferred_element_type=jnp.float32)
    gated = expert_flat * gate_rep                                                # [TB, E*C]

    out = gated[:, :n_classes]
    for e in range(1, n_experts):              # static unroll; slices are 128-aligned
        out = out + gated[:, e * n_classes:(e + 1) * n_classes]
    o_ref[...] = out.astype(o_ref.dtype)


# ------------------------------------------------------------------------ param packing
def pack_moe_params(gate_w, gate_b, expert_w, expert_b, *, param_dtype=None):
    """One-time packing of MoE parameters into the fused kernel operands.

    Call once at init and cache the result with the parameters -- this is ordinary
    (jit-able) JAX and must not run on the per-call critical path.

    gate_w: [D, E]; gate_b: [E] or [1, E]; expert_w: [E, D, C]; expert_b: [E, C].
    """
    d_model, n_experts = gate_w.shape
    n_classes = expert_w.shape[2]
    ec = n_experts * n_classes
    dt = jnp.dtype(param_dtype) if param_dtype is not None else jnp.dtype(gate_w.dtype)

    # Fused weight slab: expert columns first (col = e*C + c), gate columns at the
    # tail -- no zero-pad columns are stored or DMA'd.
    w_exp = jnp.transpose(expert_w, (1, 0, 2)).reshape(d_model, ec)
    w_all = jnp.concatenate([w_exp, gate_w], axis=1).astype(dt)                   # [D, E*C+E]
    b_all = jnp.concatenate(
        [expert_b.reshape(1, ec), gate_b.reshape(1, n_experts)], axis=1
    ).astype(jnp.float32)                                                         # [1, E*C+E]
    r_mat = jnp.repeat(jnp.eye(n_experts, dtype=dt), n_classes, axis=1)           # [E, E*C]

    if n_classes % 128 == 0:
        c_pad = n_classes
        s_mat = None                   # reduction done with lane-dense adds in-kernel
    else:
        c_pad = _round_up(n_classes, 128)   # lane-dense (unmasked-store) output width
        s_mat = jnp.tile(jnp.eye(n_classes, c_pad, dtype=dt), (n_experts, 1))     # [E*C, C_pad]

    return dict(w_all=w_all, b_all=b_all, r_mat=r_mat, s_mat=s_mat,
                n_experts=n_experts, d_model=d_model, n_classes=n_classes, c_pad=c_pad)


# ----------------------------------------------------------------------------- forward
def moe_forward(x, packed, *, tile_b=256):
    """x: [B, D]; packed: result of pack_moe_params(). Returns [B, C]."""
    w_all, b_all = packed["w_all"], packed["b_all"]
    r_mat, s_mat = packed["r_mat"], packed["s_mat"]
    n_experts, d_model = packed["n_experts"], packed["d_model"]
    n_classes, c_pad = packed["n_classes"], packed["c_pad"]
    ec = n_experts * n_classes
    w_cols = ec + n_experts

    B, D = x.shape
    assert D == d_model
    out_dtype = x.dtype
    compute_dtype = w_all.dtype
    x = x.astype(compute_dtype)

    # Batch tiling: respect the sublane multiple of the compute dtype and keep >= 2
    # grid steps when B allows (v7x: both TCs get work; all gens: x/out DMA overlap).
    itemsize = jnp.dtype(compute_dtype).itemsize
    sub = {4: 8, 2: 16, 1: 32}[itemsize]
    b_ceil = _round_up(B, sub)
    tb = max(sub, min(tile_b, b_ceil))
    if b_ceil // tb < 2 and b_ceil >= 2 * sub:
        tb = _round_up(b_ceil // 2, sub)
    b_pad = _round_up(B, tb)
    if b_pad != B:
        x = jnp.pad(x, ((0, b_pad - B), (0, 0)))
    grid = (b_pad // tb,)

    # VMEM budget from the actual footprint (resident weights single-buffered,
    # x/out double-buffered), capped at v7x's 64 MiB physical VMEM.
    const_ops = [w_all, b_all, r_mat] + ([s_mat] if s_mat is not None else [])
    resident = sum(int(a.size) * jnp.dtype(a.dtype).itemsize for a in const_ops)
    out_item = jnp.dtype(out_dtype).itemsize
    pipelined = 2 * tb * D * itemsize + 2 * tb * c_pad * out_item
    vmem_limit = int(min(max(2 * (resident + pipelined) + (8 << 20), 32 << 20), 64 << 20))

    flops = (2 * b_pad * D * w_cols          # fused expert+gate matmul
             + 2 * b_pad * n_experts * ec    # gate repeat matmul
             + 2 * b_pad * ec)               # gating multiply + expert reduction
    if s_mat is not None:
        flops += 2 * b_pad * ec * c_pad
    bytes_accessed = resident + b_pad * D * itemsize + b_pad * c_pad * out_item

    const_buf = pl.Buffered(1)   # constant index_map -> never re-DMA'd; single buffer
    in_specs = [
        pl.BlockSpec((tb, D), lambda i: (i, 0)),                                   # x tile
        pl.BlockSpec((D, w_cols), lambda i: (0, 0), pipeline_mode=const_buf),      # weights
        pl.BlockSpec((1, w_cols), lambda i: (0, 0), pipeline_mode=const_buf),      # biases
        pl.BlockSpec((n_experts, ec), lambda i: (0, 0), pipeline_mode=const_buf),  # gate repeat
    ]
    operands = [x, w_all, b_all, r_mat]
    if s_mat is not None:
        in_specs.append(pl.BlockSpec((ec, c_pad), lambda i: (0, 0), pipeline_mode=const_buf))
        operands.append(s_mat)
        kernel = _moe_kernel_selector
    else:
        kernel = _moe_kernel_sum

    out = pl.pallas_call(
        kernel,
        out_shape=jax.ShapeDtypeStruct((b_pad, c_pad), out_dtype),
        grid_spec=pltpu.PrefetchScalarGridSpec(
            num_scalar_prefetch=0,
            grid=grid,
            in_specs=in_specs,
            out_specs=pl.BlockSpec((tb, c_pad), lambda i: (i, 0)),
        ),
        compiler_params=pltpu.CompilerParams(
            dimension_semantics=("parallel",),     # v7x: batch axis split across both TCs
            vmem_limit_bytes=vmem_limit,
        ),
        cost_estimate=pl.CostEstimate(
            flops=int(flops),
            transcendentals=int(b_pad * n_experts),
            bytes_accessed=int(bytes_accessed),
        ),
    )(*operands)

    return out[:B, :n_classes]


# ---------------------------------------------------------------------------- reference
def reference_moe(x, gate_w, gate_b, expert_w, expert_b):
    logits = jnp.dot(x, gate_w, precision="highest") + gate_b.reshape(1, -1)
    gate = jax.nn.softmax(logits, axis=1)
    expert_out = jnp.einsum("bd,edc->bec", x, expert_w, precision="highest") + expert_b[None]
    return jnp.sum(gate[:, :, None] * expert_out, axis=1)


if __name__ == "__main__":
    num_experts = 4
    d_model = 64
    num_classes = 32
    batch = 256          # tb=128 -> grid=(2,): both v7x TCs get a step, DMA pipelines

    key = jax.random.PRNGKey(0)
    kx, kgw, kgb, kew, keb = jax.random.split(key, 5)

    x = jax.random.normal(kx, (batch, d_model), dtype=jnp.float32)
    # Deterministic synthetic parameters (shapes match the nn.Linear layers).
    gate_w = jax.random.normal(kgw, (d_model, num_experts), dtype=jnp.float32) * 0.1
    gate_b = jax.random.normal(kgb, (1, num_experts), dtype=jnp.float32) * 0.1
    expert_w = jax.random.normal(kew, (num_experts, d_model, num_classes), dtype=jnp.float32) * 0.1
    expert_b = jax.random.normal(keb, (num_experts, num_classes), dtype=jnp.float32) * 0.1

    # Pack once at init (cache with the params); forward reuses the packed operands.
    packed = pack_moe_params(gate_w, gate_b, expert_w, expert_b)
    out = jax.block_until_ready(moe_forward(x, packed))
    ref = reference_moe(x, gate_w, gate_b, expert_w, expert_b)
    assert out.shape == (batch, num_classes)
    assert jnp.allclose(out, ref, atol=1e-3, rtol=1e-3), float(jnp.max(jnp.abs(out - ref)))

    # Also exercise the production reduction path (C multiple of 128 -> no selector matmul).
    num_classes2 = 128
    kew2, keb2 = jax.random.split(keb)
    expert_w2 = jax.random.normal(kew2, (num_experts, d_model, num_classes2), jnp.float32) * 0.1
    expert_b2 = jax.random.normal(keb2, (num_experts, num_classes2), jnp.float32) * 0.1
    packed2 = pack_moe_params(gate_w, gate_b, expert_w2, expert_b2)
    out2 = jax.block_until_ready(moe_forward(x, packed2))
    ref2 = reference_moe(x, gate_w, gate_b, expert_w2, expert_b2)
    assert out2.shape == (batch, num_classes2)
    assert jnp.allclose(out2, ref2, atol=1e-3, rtol=1e-3), float(jnp.max(jnp.abs(out2 - ref2)))

    print("KERNEL_OK")
</pallas_src>

<mosaic_0001>
module attributes {stable_mosaic.version = 11 : i64} {
  func.func @_moe_kernel_selector(%arg0: i32, %arg1: memref<128x64xf32, #tpu.memory_space<vmem>>, %arg2: memref<64x132xf32, #tpu.memory_space<vmem>>, %arg3: memref<1x132xf32, #tpu.memory_space<vmem>>, %arg4: memref<4x128xf32, #tpu.memory_space<vmem>>, %arg5: memref<128x128xf32, #tpu.memory_space<vmem>>, %arg6: memref<128x128xf32, #tpu.memory_space<vmem>>) attributes {dimension_semantics = [#tpu.dimension_semantics<parallel>], iteration_bounds = array<i64: 2>, scalar_prefetch = 0 : i64, scratch_operands = 0 : i64, tpu.core_type = #tpu.core_type<tc>, window_params = [{transform_indices = @transform_0, window_bounds = array<i64: 128, 64>}, {pipeline_mode = #tpu.pipeline_mode<synchronous>, transform_indices = @transform_1, window_bounds = array<i64: 64, 132>}, {pipeline_mode = #tpu.pipeline_mode<synchronous>, transform_indices = @transform_2, window_bounds = array<i64: 1, 132>}, {pipeline_mode = #tpu.pipeline_mode<synchronous>, transform_indices = @transform_3, window_bounds = array<i64: 4, 128>}, {pipeline_mode = #tpu.pipeline_mode<synchronous>, transform_indices = @transform_4, window_bounds = array<i64: 128, 128>}, {transform_indices = @transform_5, window_bounds = array<i64: 128, 128>}]} {
    %c0 = arith.constant 0 : index
    %c0_0 = arith.constant 0 : index
    %0 = vector.load %arg1[%c0, %c0_0] : memref<128x64xf32, #tpu.memory_space<vmem>>, vector<128x64xf32>
    %c0_1 = arith.constant 0 : index
    %c0_2 = arith.constant 0 : index
    %1 = vector.load %arg2[%c0_1, %c0_2] : memref<64x132xf32, #tpu.memory_space<vmem>>, vector<64x132xf32>
    %cst = arith.constant dense<0.000000e+00> : vector<128x132xf32>
    %2 = tpu.matmul %0, %1, %cst {dimension_numbers = #tpu.dot_dimension_numbers<[1], [0], [0], [1], [0, 0, 1, 1], [], []>} : vector<128x64xf32>, vector<64x132xf32>, vector<128x132xf32> -> vector<128x132xf32>
    %c0_3 = arith.constant 0 : index
    %c0_4 = arith.constant 0 : index
    %3 = vector.load %arg3[%c0_3, %c0_4] : memref<1x132xf32, #tpu.memory_space<vmem>>, vector<1x132xf32>
    %4 = vector.broadcast %3 : vector<1x132xf32> to vector<128x132xf32>
    %5 = arith.addf %2, %4 : vector<128x132xf32>
    %6 = vector.extract_strided_slice %5 {offsets = [0, 128], sizes = [128, 4], strides = [1, 1]} : vector<128x132xf32> to vector<128x4xf32>
    %cst_5 = arith.constant dense<0xFF800000> : vector<128xf32>
    %7 = vector.multi_reduction <maximumf>, %6, %cst_5 [1] : vector<128x4xf32> to vector<128xf32>
    %8 = vector.shape_cast %7 : vector<128xf32> to vector<128x1xf32>
    %9 = vector.broadcast %8 : vector<128x1xf32> to vector<128x4xf32>
    %10 = arith.subf %6, %9 : vector<128x4xf32>
    %11 = math.exp %10 : vector<128x4xf32>
    %cst_6 = arith.constant dense<0.000000e+00> : vector<128xf32>
    %12 = vector.multi_reduction <add>, %11, %cst_6 [1] : vector<128x4xf32> to vector<128xf32>
    %13 = vector.shape_cast %12 : vector<128xf32> to vector<128x1xf32>
    %14 = tpu.reciprocal %13 : vector<128x1xf32> -> vector<128x1xf32>
    %15 = vector.broadcast %14 : vector<128x1xf32> to vector<128x4xf32>
    %16 = arith.mulf %11, %15 : vector<128x4xf32>
    %17 = vector.extract_strided_slice %5 {offsets = [0, 0], sizes = [128, 128], strides = [1, 1]} : vector<128x132xf32> to vector<128x128xf32>
    %c0_7 = arith.constant 0 : index
    %c0_8 = arith.constant 0 : index
    %18 = vector.load %arg4[%c0_7, %c0_8] : memref<4x128xf32, #tpu.memory_space<vmem>>, vector<4x128xf32>
    %cst_9 = arith.constant dense<0.000000e+00> : vector<128x128xf32>
    %19 = tpu.matmul %16, %18, %cst_9 {dimension_numbers = #tpu.dot_dimension_numbers<[1], [0], [0], [1], [0, 0, 1, 1], [], []>} : vector<128x4xf32>, vector<4x128xf32>, vector<128x128xf32> -> vector<128x128xf32>
    %20 = arith.mulf %17, %19 : vector<128x128xf32>
    %c0_10 = arith.constant 0 : index
    %c0_11 = arith.constant 0 : index
    %21 = vector.load %arg5[%c0_10, %c0_11] : memref<128x128xf32, #tpu.memory_space<vmem>>, vector<128x128xf32>
    %cst_12 = arith.constant dense<0.000000e+00> : vector<128x128xf32>
    %22 = tpu.matmul %20, %21, %cst_12 {dimension_numbers = #tpu.dot_dimension_numbers<[1], [0], [0], [1], [0, 0, 1, 1], [], []>} : vector<128x128xf32>, vector<128x128xf32>, vector<128x128xf32> -> vector<128x128xf32>
    %c0_13 = arith.constant 0 : index
    %c0_14 = arith.constant 0 : index
    %23 = vector.load %arg6[%c0_13, %c0_14] : memref<128x128xf32, #tpu.memory_space<vmem>>, vector<128x128xf32>
    tpu.vector_store %arg6[%c0_13, %c0_14], %22 {strides = array<i32>} : memref<128x128xf32, #tpu.memory_space<vmem>>, vector<128x128xf32>,
    return
  }
  func.func @transform_0(%arg0: i32) -> (i32, i32) {
    %c0_i32 = arith.constant 0 : i32
    %c0_i32_0 = arith.constant 0 : i32
    return %arg0, %c0_i32 : i32, i32
  }
  func.func @transform_1(%arg0: i32) -> (i32, i32) {
    %c0_i32 = arith.constant 0 : i32
    %c0_i32_0 = arith.constant 0 : i32
    %c0_i32_1 = arith.constant 0 : i32
    return %c0_i32, %c0_i32_0 : i32, i32
  }
  func.func @transform_2(%arg0: i32) -> (i32, i32) {
    %c0_i32 = arith.constant 0 : i32
    %c0_i32_0 = arith.constant 0 : i32
    %c0_i32_1 = arith.constant 0 : i32
    return %c0_i32, %c0_i32_0 : i32, i32
  }
  func.func @transform_3(%arg0: i32) -> (i32, i32) {
    %c0_i32 = arith.constant 0 : i32
    %c0_i32_0 = arith.constant 0 : i32
    %c0_i32_1 = arith.constant 0 : i32
    return %c0_i32, %c0_i32_0 : i32, i32
  }
  func.func @transform_4(%arg0: i32) -> (i32, i32) {
    %c0_i32 = arith.constant 0 : i32
    %c0_i32_0 = arith.constant 0 : i32
    %c0_i32_1 = arith.constant 0 : i32
    return %c0_i32, %c0_i32_0 : i32, i32
  }
  func.func @transform_5(%arg0: i32) -> (i32, i32) {
    %c0_i32 = arith.constant 0 : i32
    %c0_i32_0 = arith.constant 0 : i32
    return %arg0, %c0_i32 : i32, i32
  }
}

</mosaic_0001>

<llo_original>
// kernel: tpu_custom_call.1
$region0: #{tpu_custom_call.1}
  #allocation0 [shape = 'u32[]', space=smem, size = 0x4, offset = 0x4, fixed_abs, tag = 'smem constant byte address 0x4 - core index']
  #allocation1 [shape = 'u32[144,128]{1,0:T(1,128)}', space=vmem, size = 0x12000, scoped, tag = 'internal scratch']
  %s0 = inlined_call_operand.vmem [shape: f32[256,64], index: 0, kind: input, shape index: {}]
  %s1 = inlined_call_operand.vmem [shape: f32[64,132], index: 1, kind: input, shape index: {}]
  %s2 = inlined_call_operand.vmem [shape: f32[1,132], index: 2, kind: input, shape index: {}]
  %s3 = inlined_call_operand.vmem [shape: f32[4,128], index: 3, kind: input, shape index: {}]
  %s4 = inlined_call_operand.vmem [shape: f32[128,128], index: 4, kind: input, shape index: {}]
  %s5 = inlined_call_operand.hbm [shape: f32[256,128], index: 5, kind: output, shape index: {}]
  %s6 = sld [smem:[#allocation0]]
  $region53: #{tpu_custom_call.1} parent=0
    _
  %s8 = ssub.s32 1, %s6
  %s9 = scalar_select 0, %s8, %s6
  $region1: #{tpu_custom_call.1} parent=0
    #allocation2 [shape = 'u8[131072]{0}', space=vmem, size = 0x20000, scoped, tag = 'output window, operand 0']
    #allocation3 [shape = 's32[2]{0}', space=sflag, size = 0x8, scoped, tag = 'scoped memory for tpu_custom_call.1']
    %10 = vsyncpa [#allocation3], 0
    %s11 = scalar_lea.sflag [#allocation3], 1
    %12 = vsyncpa %s11, 0
    loop: start=0, step=1, limit=4
    $region2: #{tpu_custom_call.1} parent=1 // loop_pre_header
      _
    $region3: #{tpu_custom_call.1} parent=1 // loop_header
      %s14 = sphi 0, %s18
      %p15 = scmp.ge.s32.totalorder %s14, 4
      %s24 = sphi 0, %s26
      %s27 = sphi 0, %s24
      %s28 = sphi 0, %s27
      %s44 = sphi 0, %s28
      %s48 = sphi 0, %s48
      %s50 = sphi 0, %s48
      %s51 = sphi 0, %s50
      %s65 = sphi 0, %s51
      %s69 = sphi 0, %s69
      %s71 = sphi 0, %s69
      %s72 = sphi 0, %s71
      %s86 = sphi 0, %s72
      %s90 = sphi 0, %s90
      %s92 = sphi 0, %s90
      %s93 = sphi 0, %s92
      %s107 = sphi 0, %s93
      %s111 = sphi 0, %s111
      %s113 = sphi 0, %s111
      %s114 = sphi 0, %s113
      %s128 = sphi 0, %s114
      %s134 = sphi 0, %s136
      %s137 = sphi 0, %s134
      %s138 = sphi 0, %s137
      %s154 = sphi 0, %s138
    $region4: #{tpu_custom_call.1} parent=1 // loop_header_branch
      %17 = sbr.rel (%p15) target = $region8
    $region5: #{tpu_custom_call.1} parent=1 // loop_body
      %s19 = ssub.s32 %s14, 1
      %s20 = ssub.s32 %s14, 2
      %s21 = sadd.s32 %s14, 1
      %s22 = ssub.s32 %s14, %s21
      %p23 = scmp.eq.s32.totalorder %s22, 0
      %s25 = sadd.s32 %s24, 1
      %s26 = scalar_select %p23, %s24, %s25
      %p29 = pneg %p23
      %p30 = scmp.eq.s32.totalorder %s14, 1
      %p31 = por %p29, %p30
      %p32 = scmp.ne.s32.totalorder %s24, %s27
      %p33 = scmp.eq.s32.totalorder %s14, 0
      %p34 = por %p32, %p33
      %p35 = scmp.ne.s32.totalorder %s24, %s27
      %p36 = scmp.eq.s32.totalorder %s19, 1
      %p37 = por %p35, %p36
      %p38 = scmp.ne.s32.totalorder %s27, %s28
      %p39 = scmp.eq.s32.totalorder %s19, 0
      %p40 = por %p38, %p39
      %p41 = scmp.ne.s32.totalorder %s27, %s28
      %p42 = scmp.eq.s32.totalorder %s20, 1
      %p43 = por %p41, %p42
      %p45 = scmp.ne.s32.totalorder %s28, %s44
      %p46 = scmp.eq.s32.totalorder %s20, 0
      %p47 = por %p45, %p46
      %s49 = sadd.s32 %s48, 1
      %p52 = scmp.eq.s32.totalorder %s14, 1
      %p53 = scmp.ne.s32.totalorder %s48, %s50
      %p54 = scmp.eq.s32.totalorder %s14, 0
      %p55 = por %p53, %p54
      %p56 = scmp.ne.s32.totalorder %s48, %s50
      %p57 = scmp.eq.s32.totalorder %s19, 1
      %p58 = por %p56, %p57
      %p59 = scmp.ne.s32.totalorder %s50, %s51
      %p60 = scmp.eq.s32.totalorder %s19, 0
      %p61 = por %p59, %p60
      %p62 = scmp.ne.s32.totalorder %s50, %s51
      %p63 = scmp.eq.s32.totalorder %s20, 1
      %p64 = por %p62, %p63
      %p66 = scmp.ne.s32.totalorder %s51, %s65
      %p67 = scmp.eq.s32.totalorder %s20, 0
      %p68 = por %p66, %p67
      %s70 = sadd.s32 %s69, 1
      %p73 = scmp.eq.s32.totalorder %s14, 1
      %p74 = scmp.ne.s32.totalorder %s69, %s71
      %p75 = scmp.eq.s32.totalorder %s14, 0
      %p76 = por %p74, %p75
      %p77 = scmp.ne.s32.totalorder %s69, %s71
      %p78 = scmp.eq.s32.totalorder %s19, 1
      %p79 = por %p77, %p78
      %p80 = scmp.ne.s32.totalorder %s71, %s72
      %p81 = scmp.eq.s32.totalorder %s19, 0
      %p82 = por %p80, %p81
      %p83 = scmp.ne.s32.totalorder %s71, %s72
      %p84 = scmp.eq.s32.totalorder %s20, 1
      %p85 = por %p83, %p84
      %p87 = scmp.ne.s32.totalorder %s72, %s86
      %p88 = scmp.eq.s32.totalorder %s20, 0
      %p89 = por %p87, %p88
      %s91 = sadd.s32 %s90, 1
      %p94 = scmp.eq.s32.totalorder %s14, 1
      %p95 = scmp.ne.s32.totalorder %s90, %s92
      %p96 = scmp.eq.s32.totalorder %s14, 0
      %p97 = por %p95, %p96
      %p98 = scmp.ne.s32.totalorder %s90, %s92
      %p99 = scmp.eq.s32.totalorder %s19, 1
      %p100 = por %p98, %p99
      %p101 = scmp.ne.s32.totalorder %s92, %s93
      %p102 = scmp.eq.s32.totalorder %s19, 0
      %p103 = por %p101, %p102
      %p104 = scmp.ne.s32.totalorder %s92, %s93
      %p105 = scmp.eq.s32.totalorder %s20, 1
      %p106 = por %p104, %p105
      %p108 = scmp.ne.s32.totalorder %s93, %s107
      %p109 = scmp.eq.s32.totalorder %s20, 0
      %p110 = por %p108, %p109
      %s112 = sadd.s32 %s111, 1
      %p115 = scmp.eq.s32.totalorder %s14, 1
      %p116 = scmp.ne.s32.totalorder %s111, %s113
      %p117 = scmp.eq.s32.totalorder %s14, 0
      %p118 = por %p116, %p117
      %p119 = scmp.ne.s32.totalorder %s111, %s113
      %p120 = scmp.eq.s32.totalorder %s19, 1
      %p121 = por %p119, %p120
      %p122 = scmp.ne.s32.totalorder %s113, %s114
      %p123 = scmp.eq.s32.totalorder %s19, 0
      %p124 = por %p122, %p123
      %p125 = scmp.ne.s32.totalorder %s113, %s114
      %p126 = scmp.eq.s32.totalorder %s20, 1
      %p127 = por %p125, %p126
      %p129 = scmp.ne.s32.totalorder %s114, %s128
      %p130 = scmp.eq.s32.totalorder %s20, 0
      %p131 = por %p129, %p130
      %s132 = ssub.s32 %s14, %s21
      %p133 = scmp.eq.s32.totalorder %s132, 0
      %s135 = sadd.s32 %s134, 1
      %s136 = scalar_select %p133, %s134, %s135
      %p139 = pneg %p133
      %p140 = scmp.eq.s32.totalorder %s14, 1
      %p141 = por %p139, %p140
      %p142 = scmp.ne.s32.totalorder %s134, %s137
      %p143 = scmp.eq.s32.totalorder %s14, 0
      %p144 = por %p142, %p143
      %p145 = scmp.ne.s32.totalorder %s134, %s137
      %p146 = scmp.eq.s32.totalorder %s19, 1
      %p147 = por %p145, %p146
      %p148 = scmp.ne.s32.totalorder %s137, %s138
      %p149 = scmp.eq.s32.totalorder %s19, 0
      %p150 = por %p148, %p149
      %p151 = scmp.ne.s32.totalorder %s137, %s138
      %p152 = scmp.eq.s32.totalorder %s20, 1
      %p153 = por %p151, %p152
      %p155 = scmp.ne.s32.totalorder %s138, %s154
      %p156 = scmp.eq.s32.totalorder %s20, 0
      %p157 = por %p155, %p156
      %p158 = scmp.le.s32.totalorder 1, %s14
      %p159 = scmp.lt.s32.totalorder %s14, 3
      %p160 = pnand %p158, %p159
      %p161 = pneg %p160
      // Predicated region
      $region9: #{tpu_custom_call.1} parent=5 // pred_check
        _
      $region10: #{tpu_custom_call.1} parent=5 // pred_check_branch
        %163 = sbr.rel (%p160) target = $region12
      $region11: #{tpu_custom_call.1} parent=5 // pred_region
        %s164 = ssub.s32 %s14, 1
        // Predicated region
        $region13: #{tpu_custom_call.1} parent=11 // pred_check
          %p165 = pneg %p61
        $region14: #{tpu_custom_call.1} parent=11 // pred_check_branch
          %167 = sbr.rel (%p165) target = $region16
        $region15: #{tpu_custom_call.1} parent=11 // pred_region
          _
        $region16: #{tpu_custom_call.1} parent=11 // pred_fallthru
          _
        // Predicated region
        $region17: #{tpu_custom_call.1} parent=11 // pred_check
          %p168 = pneg %p82
        $region18: #{tpu_custom_call.1} parent=11 // pred_check_branch
          %170 = sbr.rel (%p168) target = $region20
        $region19: #{tpu_custom_call.1} parent=11 // pred_region
          _
        $region20: #{tpu_custom_call.1} parent=11 // pred_fallthru
          _
        // Predicated region
        $region21: #{tpu_custom_call.1} parent=11 // pred_check
          %p171 = pneg %p103
        $region22: #{tpu_custom_call.1} parent=11 // pred_check_branch
          %173 = sbr.rel (%p171) target = $region24
        $region23: #{tpu_custom_call.1} parent=11 // pred_region
          _
        $region24: #{tpu_custom_call.1} parent=11 // pred_fallthru
          _
        // Predicated region
        $region25: #{tpu_custom_call.1} parent=11 // pred_check
          %p174 = pneg %p124
        $region26: #{tpu_custom_call.1} parent=11 // pred_check_branch
          %176 = sbr.rel (%p174) target = $region28
        $region27: #{tpu_custom_call.1} parent=11 // pred_region
          _
        $region28: #{tpu_custom_call.1} parent=11 // pred_fallthru
          _
      $region12: #{tpu_custom_call.1} parent=5 // pred_fallthru
        _
      %p177 = scmp.lt.s32.totalorder %s14, 2
      // Predicated region
      $region29: #{tpu_custom_call.1} parent=5 // pred_check
        %p178 = pneg %p177
      $region30: #{tpu_custom_call.1} parent=5 // pred_check_branch
        %180 = sbr.rel (%p178) target = $region32
      $region31: #{tpu_custom_call.1} parent=5 // pred_region
        // Predicated region
        $region33: #{tpu_custom_call.1} parent=31 // pred_check
          %p181 = pneg %p34
        $region34: #{tpu_custom_call.1} parent=31 // pred_check_branch
          %183 = sbr.rel (%p181) target = $region36
        $region35: #{tpu_custom_call.1} parent=31 // pred_region
          %s184 = smul.u32 16, %s14
          %p185 = scmp.lt.s32.totalorder %s184, 31
          %s186 = scalar_select %p185, %s184, 31
          %s187 = smul.addr %s186, 8
          %s188 = scalar_lea.vmem %s0, %s187
          %s189 = smul.u32 16, %s14
        $region36: #{tpu_custom_call.1} parent=31 // pred_fallthru
          _
      $region32: #{tpu_custom_call.1} parent=5 // pred_fallthru
        _
      %p190 = scmp.le.s32.totalorder 1, %s14
      %p191 = scmp.lt.s32.totalorder %s14, 3
      %p192 = pnand %p190, %p191
      %p193 = pneg %p192
      // Predicated region
      $region37: #{tpu_custom_call.1} parent=5 // pred_check
        _
      $region38: #{tpu_custom_call.1} parent=5 // pred_check_branch
        %195 = sbr.rel (%p192) target = $region40
      $region39: #{tpu_custom_call.1} parent=5 // pred_region
        %s196 = ssub.s32 %s14, 1
        %s197 = smul.u32 16, %s19
        %p198 = scmp.lt.s32.totalorder %s197, 31
        %s199 = scalar_select %p198, %s197, 31
        %s200 = smul.addr %s199, 8
        %s201 = scalar_lea.vmem %s0, %s200
        %p202 = pneg %p40
        %p203 = pneg %p37
        %p204 = pneg %p61
        %p205 = pneg %p58
        %p206 = pneg %p82
        %p207 = pneg %p79
        %p208 = pneg %p103
        %p209 = pneg %p100
        %p210 = pneg %p124
        %p211 = pneg %p121
        %p212 = pneg %p150
        %p213 = pneg %p147
        %s214 = sand.u32 %s137, 1
        %s215 = scalar_lea.sflag [#allocation3], %s214
        %s216 = sand.u32 %s137, 1
        %s217 = smul.addr %s216, 128
        %s218 = scalar_lea.vmem [#allocation2], %s217
        %s219 = smul.u32 16, %s19
        %p220 = scmp.lt.s32.totalorder %s219, 31
        %s221 = scalar_select %p220, %s219, 31
        %s222 = smul.addr %s221, 8
        %s223 = scalar_lea.vmem %s0, %s222
        %s224 = smul.u32 16, %s19
        %s225 = smul.u32 16, %s19
        %v226 = vld [vmem:[%s223] sm:$0xff]
        %v227 = vld [vmem:[%s223 + $0x8] sm:$0xff]
        %v228 = vld [vmem:[%s223 + $0x10] sm:$0xff]
        %v229 = vld [vmem:[%s223 + $0x18] sm:$0xff]
        %v230 = vld [vmem:[%s223 + $0x20] sm:$0xff]
        %v231 = vld [vmem:[%s223 + $0x28] sm:$0xff]
        %v232 = vld [vmem:[%s223 + $0x30] sm:$0xff]
        %v233 = vld [vmem:[%s223 + $0x38] sm:$0xff]
        %v234 = vld [vmem:[%s223 + $0x40] sm:$0xff]
        %v235 = vld [vmem:[%s223 + $0x48] sm:$0xff]
        %v236 = vld [vmem:[%s223 + $0x50] sm:$0xff]
        %v237 = vld [vmem:[%s223 + $0x58] sm:$0xff]
        %v238 = vld [vmem:[%s223 + $0x60] sm:$0xff]
        %v239 = vld [vmem:[%s223 + $0x68] sm:$0xff]
        %v240 = vld [vmem:[%s223 + $0x70] sm:$0xff]
        %v241 = vld [vmem:[%s223 + $0x78] sm:$0xff]
        %v242 = vld [vmem:[%s1] sm:$0xff]
        %v243 = vld [vmem:[%s1 + $0x8] sm:$0xff]
        %v244 = vld [vmem:[%s1 + $0x10] sm:$0xff]
        %v245 = vld [vmem:[%s1 + $0x18] sm:$0xff]
        %v246 = vld [vmem:[%s1 + $0x20] sm:$0xff]
        %v247 = vld [vmem:[%s1 + $0x28] sm:$0xff]
        %v248 = vld [vmem:[%s1 + $0x30] sm:$0xff]
        %v249 = vld [vmem:[%s1 + $0x38] sm:$0xff]
        %v250 = vld [vmem:[%s1 + $0x40] sm:$0xff]
        %v251 = vld [vmem:[%s1 + $0x48] sm:$0xff]
        %v252 = vld [vmem:[%s1 + $0x50] sm:$0xff]
        %v253 = vld [vmem:[%s1 + $0x58] sm:$0xff]
        %v254 = vld [vmem:[%s1 + $0x60] sm:$0xff]
        %v255 = vld [vmem:[%s1 + $0x68] sm:$0xff]
        %v256 = vld [vmem:[%s1 + $0x70] sm:$0xff]
        %v257 = vld [vmem:[%s1 + $0x78] sm:$0xff]
        %v258 = vld [vmem:[%s2] sm:$0x3]
        %v260 = vlaneseq
        %v261 = vshrl.u32 %v260, 7
        %v262 = vsub.s32 0, %v261
        %v263 = vrot.slane %v258, %v262
        %v264 = vlaneseq
        %v265 = vshrl.u32 %v264, 7
        %v266 = vsub.s32 1, %v265
        %v267 = vrot.slane %v258, %v266
        %vm270 = vcmask 523264
        %v272 = vsel %vm270, %v226, 0
        %v275 = vsel %vm270, %v227, 0
        %v278 = vsel %vm270, %v228, 0
        %v281 = vsel %vm270, %v229, 0
        %v284 = vsel %vm270, %v230, 0
        %v287 = vsel %vm270, %v231, 0
        %v290 = vsel %vm270, %v232, 0
        %v293 = vsel %vm270, %v233, 0
        %v296 = vsel %vm270, %v234, 0
        %v299 = vsel %vm270, %v235, 0
        %v302 = vsel %vm270, %v236, 0
        %v305 = vsel %vm270, %v237, 0
        %v308 = vsel %vm270, %v238, 0
        %v311 = vsel %vm270, %v239, 0
        %v314 = vsel %vm270, %v240, 0
        %v317 = vsel %vm270, %v241, 0
        %319 = vmatprep.subr.mxu0 %v243
        %320 = vmatpush1.msra.mxu0 %v242
        %321 = vmatprep.subr.mxu0 %v245
        %322 = vmatpush1.msra.mxu0 %v244
        %323 = vmatprep.subr.mxu0 %v247
        %324 = vmatpush1.msra.mxu0 %v246
        %325 = vmatprep.subr.mxu0 %v249
        %326 = vmatpush1.msra.mxu0 %v248
        %327 = vmatprep.subr.mxu0 %v251
        %328 = vmatpush1.msra.mxu0 %v250
        %329 = vmatprep.subr.mxu0 %v253
        %330 = vmatpush1.msra.mxu0 %v252
        %331 = vmatprep.subr.mxu0 %v255
        %332 = vmatpush1.msra.mxu0 %v254
        %333 = vmatprep.subr.mxu0 %v257
        %334 = vmatpush1.msra.mxu0 %v256
        %335 = vmatprep.subr.mxu0 0.0
        %336 = vmatpush1.msra.mxu0 0.0
        %337 = vmatprep.subr.mxu0 0.0
        %338 = vmatpush1.msra.mxu0 0.0
        %339 = vmatprep.subr.mxu0 0.0
        %340 = vmatpush1.msra.mxu0 0.0
        %341 = vmatprep.subr.mxu0 0.0
        %342 = vmatpush1.msra.mxu0 0.0
        %343 = vmatprep.subr.mxu0 0.0
        %344 = vmatpush1.msra.mxu0 0.0
        %345 = vmatprep.subr.mxu0 0.0
        %346 = vmatpush1.msra.mxu0 0.0
        %347 = vmatprep.subr.mxu0 0.0
        %348 = vmatpush1.msra.mxu0 0.0
        %349 = vmatprep.subr.mxu0 0.0
        %350 = vmatpush1.msra.mxu0 0.0
        %351 = vmatprep.subr.mxu0 0.0
        %352 = vmatpush1.msra.mxu0 0.0
        %353 = vmatprep.subr.mxu0 0.0
        %354 = vmatpush1.msra.mxu0 0.0
        %355 = vmatprep.subr.mxu0 0.0
        %356 = vmatpush1.msra.mxu0 0.0
        %357 = vmatprep.subr.mxu0 0.0
        %358 = vmatpush1.msra.mxu0 0.0
        %359 = vmatprep.subr.mxu0 0.0
        %360 = vmatpush1.msra.mxu0 0.0
        %361 = vmatprep.subr.mxu0 0.0
        %362 = vmatpush1.msra.mxu0 0.0
        %363 = vmatprep.subr.mxu0 0.0
        %364 = vmatpush1.msra.mxu0 0.0
        %365 = vmatprep.subr.mxu0 0.0
        %366 = vmatpush1.msra.mxu0 0.0
        %367 = vmatprep.subr.mxu0 0.0
        %368 = vmatpush1.msra.mxu0 0.0
        %369 = vmatprep.subr.mxu0 0.0
        %370 = vmatpush1.msra.mxu0 0.0
        %371 = vmatprep.subr.mxu0 0.0
        %372 = vmatpush1.msra.mxu0 0.0
        %373 = vmatprep.subr.mxu0 0.0
        %374 = vmatpush1.msra.mxu0 0.0
        %375 = vmatprep.subr.mxu0 0.0
        %376 = vmatpush1.msra.mxu0 0.0
        %377 = vmatprep.subr.mxu0 0.0
        %378 = vmatpush1.msra.mxu0 0.0
        %379 = vmatprep.subr.mxu0 0.0
        %380 = vmatpush1.msra.mxu0 0.0
        %381 = vmatprep.subr.mxu0 0.0
        %382 = vmatpush1.msra.mxu0 0.0
        %383 = vmatprep.mubr.f32.mxu0 0.0
        %384 = vmatmul.mubr.f32.gmra.mrb[0].mxu0 %v272
        %v385 = vpop.f32.mrb[0].mxu0
        %v386 = vadd.f32 %v263, %v385
        %v387 = vpop.f32.mrb[0].mxu0
        %v388 = vadd.f32 %v267, %v387
        %389 = vmatprep.mubr.f32.mxu0 0.0
        %390 = vmatmul.mubr.f32.gmra.mrb[0].mxu0 %v275
        %v391 = vpop.f32.mrb[0].mxu0
        %v392 = vadd.f32 %v263, %v391
        %v393 = vpop.f32.mrb[0].mxu0
        %v394 = vadd.f32 %v267, %v393
        %395 = vmatprep.mubr.f32.mxu0 0.0
        %396 = vmatmul.mubr.f32.gmra.mrb[0].mxu0 %v278
        %v397 = vpop.f32.mrb[0].mxu0
        %v398 = vadd.f32 %v263, %v397
        %v399 = vpop.f32.mrb[0].mxu0
        %v400 = vadd.f32 %v267, %v399
        %401 = vmatprep.mubr.f32.mxu0 0.0
        %402 = vmatmul.mubr.f32.gmra.mrb[0].mxu0 %v281
        %v403 = vpop.f32.mrb[0].mxu0
        %v404 = vadd.f32 %v263, %v403
        %v405 = vpop.f32.mrb[0].mxu0
        %v406 = vadd.f32 %v267, %v405
        %407 = vmatprep.mubr.f32.mxu0 0.0
        %408 = vmatmul.mubr.f32.gmra.mrb[0].mxu0 %v284
        %v409 = vpop.f32.mrb[0].mxu0
        %v410 = vadd.f32 %v263, %v409
        %v411 = vpop.f32.mrb[0].mxu0
        %v412 = vadd.f32 %v267, %v411
        %413 = vmatprep.mubr.f32.mxu0 0.0
        %414 = vmatmul.mubr.f32.gmra.mrb[0].mxu0 %v287
        %v415 = vpop.f32.mrb[0].mxu0
        %v416 = vadd.f32 %v263, %v415
        %v417 = vpop.f32.mrb[0].mxu0
        %v418 = vadd.f32 %v267, %v417
        %419 = vmatprep.mubr.f32.mxu0 0.0
        %420 = vmatmul.mubr.f32.gmra.mrb[0].mxu0 %v290
        %v421 = vpop.f32.mrb[0].mxu0
        %v422 = vadd.f32 %v263, %v421
        %v423 = vpop.f32.mrb[0].mxu0
        %v424 = vadd.f32 %v267, %v423
        %425 = vmatprep.mubr.f32.mxu0 0.0
        %426 = vmatmul.mubr.f32.gmra.mrb[0].mxu0 %v293
        %v427 = vpop.f32.mrb[0].mxu0
        %v428 = vadd.f32 %v263, %v427
        %v429 = vpop.f32.mrb[0].mxu0
        %v430 = vadd.f32 %v267, %v429
        %431 = vmatprep.mubr.f32.mxu0 0.0
        %432 = vmatmul.mubr.f32.gmra.mrb[0].mxu0 %v296
        %v433 = vpop.f32.mrb[0].mxu0
        %v434 = vadd.f32 %v263, %v433
        %v435 = vpop.f32.mrb[0].mxu0
        %v436 = vadd.f32 %v267, %v435
        %437 = vmatprep.mubr.f32.mxu0 0.0
        %438 = vmatmul.mubr.f32.gmra.mrb[0].mxu0 %v299
        %v439 = vpop.f32.mrb[0].mxu0
        %v440 = vadd.f32 %v263, %v439
        %v441 = vpop.f32.mrb[0].mxu0
        %v442 = vadd.f32 %v267, %v441
        %443 = vmatprep.mubr.f32.mxu0 0.0
        %444 = vmatmul.mubr.f32.gmra.mrb[0].mxu0 %v302
        %v445 = vpop.f32.mrb[0].mxu0
        %v446 = vadd.f32 %v263, %v445
        %v447 = vpop.f32.mrb[0].mxu0
        %v448 = vadd.f32 %v267, %v447
        %449 = vmatprep.mubr.f32.mxu0 0.0
        %450 = vmatmul.mubr.f32.gmra.mrb[0].mxu0 %v305
        %v451 = vpop.f32.mrb[0].mxu0
        %v452 = vadd.f32 %v263, %v451
        %v453 = vpop.f32.mrb[0].mxu0
        %v454 = vadd.f32 %v267, %v453
        %455 = vmatprep.mubr.f32.mxu0 0.0
        %456 = vmatmul.mubr.f32.gmra.mrb[0].mxu0 %v308
        %v457 = vpop.f32.mrb[0].mxu0
        %v458 = vadd.f32 %v263, %v457
        %v459 = vpop.f32.mrb[0].mxu0
        %v460 = vadd.f32 %v267, %v459
        %461 = vmatprep.mubr.f32.mxu0 0.0
        %462 = vmatmul.mubr.f32.gmra.mrb[0].mxu0 %v311
        %v463 = vpop.f32.mrb[0].mxu0
        %v464 = vadd.f32 %v263, %v463
        %v465 = vpop.f32.mrb[0].mxu0
        %v466 = vadd.f32 %v267, %v465
        %467 = vmatprep.mubr.f32.mxu0 0.0
        %468 = vmatmul.mubr.f32.gmra.mrb[0].mxu0 %v314
        %v469 = vpop.f32.mrb[0].mxu0
        %v470 = vadd.f32 %v263, %v469
        %v471 = vpop.f32.mrb[0].mxu0
        %v472 = vadd.f32 %v267, %v471
        %473 = vmatprep.mubr.f32.mxu0 0.0
        %474 = vmatmul.mubr.f32.gmra.mrb[0].mxu0 %v317
        %v475 = vpop.f32.mrb[0].mxu0
        %v476 = vadd.f32 %v263, %v475
        %v477 = vpop.f32.mrb[0].mxu0
        %v478 = vadd.f32 %v267, %v477
        %479 = vdwg.mxu0
        %vm480 = vcmask 31744
        %v481 = vsel %vm480, %v388, -inf
        %482 = vmax.xlane.f32.xlu0 %v481
        %v483 = vpop.xlane.xlu0 %482
        %v484 = vsel %vm480, %v394, -inf
        %485 = vmax.xlane.f32.xlu0 %v484
        %v486 = vpop.xlane.xlu0 %485
        %v487 = vsel %vm480, %v400, -inf
        %488 = vmax.xlane.f32.xlu0 %v487
        %v489 = vpop.xlane.xlu0 %488
        %v490 = vsel %vm480, %v406, -inf
        %491 = vmax.xlane.f32.xlu0 %v490
        %v492 = vpop.xlane.xlu0 %491
        %v493 = vsel %vm480, %v412, -inf
        %494 = vmax.xlane.f32.xlu0 %v493
        %v495 = vpop.xlane.xlu0 %494
        %v496 = vsel %vm480, %v418, -inf
        %497 = vmax.xlane.f32.xlu0 %v496
        %v498 = vpop.xlane.xlu0 %497
        %v499 = vsel %vm480, %v424, -inf
        %500 = vmax.xlane.f32.xlu0 %v499
        %v501 = vpop.xlane.xlu0 %500
        %v502 = vsel %vm480, %v430, -inf
        %503 = vmax.xlane.f32.xlu0 %v502
        %v504 = vpop.xlane.xlu0 %503
        %v505 = vsel %vm480, %v436, -inf
        %506 = vmax.xlane.f32.xlu0 %v505
        %v507 = vpop.xlane.xlu0 %506
        %v508 = vsel %vm480, %v442, -inf
        %509 = vmax.xlane.f32.xlu0 %v508
        %v510 = vpop.xlane.xlu0 %509
        %v511 = vsel %vm480, %v448, -inf
        %512 = vmax.xlane.f32.xlu0 %v511
        %v513 = vpop.xlane.xlu0 %512
        %v514 = vsel %vm480, %v454, -inf
        %515 = vmax.xlane.f32.xlu0 %v514
        %v516 = vpop.xlane.xlu0 %515
        %v517 = vsel %vm480, %v460, -inf
        %518 = vmax.xlane.f32.xlu0 %v517
        %v519 = vpop.xlane.xlu0 %518
        %v520 = vsel %vm480, %v466, -inf
        %521 = vmax.xlane.f32.xlu0 %v520
        %v522 = vpop.xlane.xlu0 %521
        %v523 = vsel %vm480, %v472, -inf
        %524 = vmax.xlane.f32.xlu0 %v523
        %v525 = vpop.xlane.xlu0 %524
        %v526 = vsel %vm480, %v478, -inf
        %527 = vmax.xlane.f32.xlu0 %v526
        %v528 = vpop.xlane.xlu0 %527
        %v529 = vsub.f32 %v388, %v483
        %v530 = vsub.f32 %v394, %v486
        %v531 = vsub.f32 %v400, %v489
        %v532 = vsub.f32 %v406, %v492
        %v533 = vsub.f32 %v412, %v495
        %v534 = vsub.f32 %v418, %v498
        %v535 = vsub.f32 %v424, %v501
        %v536 = vsub.f32 %v430, %v504
        %v537 = vsub.f32 %v436, %v507
        %v538 = vsub.f32 %v442, %v510
        %v539 = vsub.f32 %v448, %v513
        %v540 = vsub.f32 %v454, %v516
        %v541 = vsub.f32 %v460, %v519
        %v542 = vsub.f32 %v466, %v522
        %v543 = vsub.f32 %v472, %v525
        %v544 = vsub.f32 %v478, %v528
        %v545 = vmul.f32 %v529, 1.442695
        %v546 = vpow.pop %v545
        %v547 = vmul.f32 %v530, 1.442695
        %v548 = vpow.pop %v547
        %v549 = vmul.f32 %v531, 1.442695
        %v550 = vpow.pop %v549
        %v551 = vmul.f32 %v532, 1.442695
        %v552 = vpow.pop %v551
        %v553 = vmul.f32 %v533, 1.442695
        %v554 = vpow.pop %v553
        %v555 = vmul.f32 %v534, 1.442695
        %v556 = vpow.pop %v555
        %v557 = vmul.f32 %v535, 1.442695
        %v558 = vpow.pop %v557
        %v559 = vmul.f32 %v536, 1.442695
        %v560 = vpow.pop %v559
        %v561 = vmul.f32 %v537, 1.442695
        %v562 = vpow.pop %v561
        %v563 = vmul.f32 %v538, 1.442695
        %v564 = vpow.pop %v563
        %v565 = vmul.f32 %v539, 1.442695
        %v566 = vpow.pop %v565
        %v567 = vmul.f32 %v540, 1.442695
        %v568 = vpow.pop %v567
        %v569 = vmul.f32 %v541, 1.442695
        %v570 = vpow.pop %v569
        %v571 = vmul.f32 %v542, 1.442695
        %v572 = vpow.pop %v571
        %v573 = vmul.f32 %v543, 1.442695
        %v574 = vpow.pop %v573
        %v575 = vmul.f32 %v544, 1.442695
        %v576 = vpow.pop %v575
        %v577 = vsel %vm480, %v546, 0.0
        %578 = vadd.xlane.f32.xlu0 %v577
        %v579 = vpop.xlane.xlu0 %578
        %v580 = vsel %vm480, %v548, 0.0
        %581 = vadd.xlane.f32.xlu0 %v580
        %v582 = vpop.xlane.xlu0 %581
        %v583 = vsel %vm480, %v550, 0.0
        %584 = vadd.xlane.f32.xlu0 %v583
        %v585 = vpop.xlane.xlu0 %584
        %v586 = vsel %vm480, %v552, 0.0
        %587 = vadd.xlane.f32.xlu0 %v586
        %v588 = vpop.xlane.xlu0 %587
        %v589 = vsel %vm480, %v554, 0.0
        %590 = vadd.xlane.f32.xlu0 %v589
        %v591 = vpop.xlane.xlu0 %590
        %v592 = vsel %vm480, %v556, 0.0
        %593 = vadd.xlane.f32.xlu0 %v592
        %v594 = vpop.xlane.xlu0 %593
        %v595 = vsel %vm480, %v558, 0.0
        %596 = vadd.xlane.f32.xlu0 %v595
        %v597 = vpop.xlane.xlu0 %596
        %v598 = vsel %vm480, %v560, 0.0
        %599 = vadd.xlane.f32.xlu0 %v598
        %v600 = vpop.xlane.xlu0 %599
        %v601 = vsel %vm480, %v562, 0.0
        %602 = vadd.xlane.f32.xlu0 %v601
        %v603 = vpop.xlane.xlu0 %602
        %v604 = vsel %vm480, %v564, 0.0
        %605 = vadd.xlane.f32.xlu0 %v604
        %v606 = vpop.xlane.xlu0 %605
        %v607 = vsel %vm480, %v566, 0.0
        %608 = vadd.xlane.f32.xlu0 %v607
        %v609 = vpop.xlane.xlu0 %608
        %v610 = vsel %vm480, %v568, 0.0
        %611 = vadd.xlane.f32.xlu0 %v610
        %v612 = vpop.xlane.xlu0 %611
        %v613 = vsel %vm480, %v570, 0.0
        %614 = vadd.xlane.f32.xlu0 %v613
        %v615 = vpop.xlane.xlu0 %614
        %v616 = vsel %vm480, %v572, 0.0
        %617 = vadd.xlane.f32.xlu0 %v616
        %v618 = vpop.xlane.xlu0 %617
        %v619 = vsel %vm480, %v574, 0.0
        %620 = vadd.xlane.f32.xlu0 %v619
        %v621 = vpop.xlane.xlu0 %620
        %v622 = vsel %vm480, %v576, 0.0
        %623 = vadd.xlane.f32.xlu0 %v622
        %v624 = vpop.xlane.xlu0 %623
        %v625 = vrcp.pop %v579
        %v626 = vrcp.pop %v582
        %v627 = vrcp.pop %v585
        %v628 = vrcp.pop %v588
        %v629 = vrcp.pop %v591
        %v630 = vrcp.pop %v594
        %v631 = vrcp.pop %v597
        %v632 = vrcp.pop %v600
        %v633 = vrcp.pop %v603
        %v634 = vrcp.pop %v606
        %v635 = vrcp.pop %v609
        %v636 = vrcp.pop %v612
        %v637 = vrcp.pop %v615
        %v638 = vrcp.pop %v618
        %v639 = vrcp.pop %v621
        %v640 = vrcp.pop %v624
        %v641 = vmul.f32 %v546, %v625
        %v642 = vmul.f32 %v548, %v626
        %v643 = vmul.f32 %v550, %v627
        %v644 = vmul.f32 %v552, %v628
        %v645 = vmul.f32 %v554, %v629
        %v646 = vmul.f32 %v556, %v630
        %v647 = vmul.f32 %v558, %v631
        %v648 = vmul.f32 %v560, %v632
        %v649 = vmul.f32 %v562, %v633
        %v650 = vmul.f32 %v564, %v634
        %v651 = vmul.f32 %v566, %v635
        %v652 = vmul.f32 %v568, %v636
        %v653 = vmul.f32 %v570, %v637
        %v654 = vmul.f32 %v572, %v638
        %v655 = vmul.f32 %v574, %v639
        %v656 = vmul.f32 %v576, %v640
        %v657 = vld [vmem:[%s3] sm:$0xf]
        %v659 = vsel %vm480, %v641, 0
        %v662 = vsel %vm480, %v642, 0
        %v665 = vsel %vm480, %v643, 0
        %v668 = vsel %vm480, %v644, 0
        %v671 = vsel %vm480, %v645, 0
        %v674 = vsel %vm480, %v646, 0
        %v677 = vsel %vm480, %v647, 0
        %v680 = vsel %vm480, %v648, 0
        %v683 = vsel %vm480, %v649, 0
        %v686 = vsel %vm480, %v650, 0
        %v689 = vsel %vm480, %v651, 0
        %v692 = vsel %vm480, %v652, 0
        %v695 = vsel %vm480, %v653, 0
        %v698 = vsel %vm480, %v654, 0
        %v701 = vsel %vm480, %v655, 0
        %v704 = vsel %vm480, %v656, 0
        %vm706 = vcmask 1043456
        %v708 = vsel %vm706, %v657, 0
        %710 = vmatprep.subr.mxu0 0.0
        %711 = vmatpush1.msra.mxu0 %v708
        %712 = vmatprep.subr.mxu0 0.0
        %713 = vmatpush1.msra.mxu0 0.0
        %714 = vmatprep.subr.mxu0 0.0
        %715 = vmatpush1.msra.mxu0 0.0
        %716 = vmatprep.subr.mxu0 0.0
        %717 = vmatpush1.msra.mxu0 0.0
        %718 = vmatprep.subr.mxu0 0.0
        %719 = vmatpush1.msra.mxu0 0.0
        %720 = vmatprep.subr.mxu0 0.0
        %721 = vmatpush1.msra.mxu0 0.0
        %722 = vmatprep.subr.mxu0 0.0
        %723 = vmatpush1.msra.mxu0 0.0
        %724 = vmatprep.subr.mxu0 0.0
        %725 = vmatpush1.msra.mxu0 0.0
        %726 = vmatprep.subr.mxu0 0.0
        %727 = vmatpush1.msra.mxu0 0.0
        %728 = vmatprep.subr.mxu0 0.0
        %729 = vmatpush1.msra.mxu0 0.0
        %730 = vmatprep.subr.mxu0 0.0
        %731 = vmatpush1.msra.mxu0 0.0
        %732 = vmatprep.subr.mxu0 0.0
        %733 = vmatpush1.msra.mxu0 0.0
        %734 = vmatprep.subr.mxu0 0.0
        %735 = vmatpush1.msra.mxu0 0.0
        %736 = vmatprep.subr.mxu0 0.0
        %737 = vmatpush1.msra.mxu0 0.0
        %738 = vmatprep.subr.mxu0 0.0
        %739 = vmatpush1.msra.mxu0 0.0
        %740 = vmatprep.subr.mxu0 0.0
        %741 = vmatpush1.msra.mxu0 0.0
        %742 = vmatprep.subr.mxu0 0.0
        %743 = vmatpush1.msra.mxu0 0.0
        %744 = vmatprep.subr.mxu0 0.0
        %745 = vmatpush1.msra.mxu0 0.0
        %746 = vmatprep.subr.mxu0 0.0
        %747 = vmatpush1.msra.mxu0 0.0
        %748 = vmatprep.subr.mxu0 0.0
        %749 = vmatpush1.msra.mxu0 0.0
        %750 = vmatprep.subr.mxu0 0.0
        %751 = vmatpush1.msra.mxu0 0.0
        %752 = vmatprep.subr.mxu0 0.0
        %753 = vmatpush1.msra.mxu0 0.0
        %754 = vmatprep.subr.mxu0 0.0
        %755 = vmatpush1.msra.mxu0 0.0
        %756 = vmatprep.subr.mxu0 0.0
        %757 = vmatpush1.msra.mxu0 0.0
        %758 = vmatprep.subr.mxu0 0.0
        %759 = vmatpush1.msra.mxu0 0.0
        %760 = vmatprep.subr.mxu0 0.0
        %761 = vmatpush1.msra.mxu0 0.0
        %762 = vmatprep.subr.mxu0 0.0
        %763 = vmatpush1.msra.mxu0 0.0
        %764 = vmatprep.subr.mxu0 0.0
        %765 = vmatpush1.msra.mxu0 0.0
        %766 = vmatprep.subr.mxu0 0.0
        %767 = vmatpush1.msra.mxu0 0.0
        %768 = vmatprep.subr.mxu0 0.0
        %769 = vmatpush1.msra.mxu0 0.0
        %770 = vmatprep.subr.mxu0 0.0
        %771 = vmatpush1.msra.mxu0 0.0
        %772 = vmatprep.subr.mxu0 0.0
        %773 = vmatpush1.msra.mxu0 0.0
        %774 = vmatprep.mubr.f32.mxu0 0.0
        %775 = vmatmul.mubr.f32.gmra.mrb[0].mxu0 %v659
        %v776 = vpop.f32.mrb[0].mxu0
        %v777 = vadd.f32 0.0, %v776
        %v778 = vpop.f32.mrb[0].mxu0
        %779 = vmatprep.mubr.f32.mxu0 0.0
        %780 = vmatmul.mubr.f32.gmra.mrb[0].mxu0 %v662
        %v781 = vpop.f32.mrb[0].mxu0
        %v782 = vadd.f32 0.0, %v781
        %v783 = vpop.f32.mrb[0].mxu0
        %784 = vmatprep.mubr.f32.mxu0 0.0
        %785 = vmatmul.mubr.f32.gmra.mrb[0].mxu0 %v665
        %v786 = vpop.f32.mrb[0].mxu0
        %v787 = vadd.f32 0.0, %v786
        %v788 = vpop.f32.mrb[0].mxu0
        %789 = vmatprep.mubr.f32.mxu0 0.0
        %790 = vmatmul.mubr.f32.gmra.mrb[0].mxu0 %v668
        %v791 = vpop.f32.mrb[0].mxu0
        %v792 = vadd.f32 0.0, %v791
        %v793 = vpop.f32.mrb[0].mxu0
        %794 = vmatprep.mubr.f32.mxu0 0.0
        %795 = vmatmul.mubr.f32.gmra.mrb[0].mxu0 %v671
        %v796 = vpop.f32.mrb[0].mxu0
        %v797 = vadd.f32 0.0, %v796
        %v798 = vpop.f32.mrb[0].mxu0
        %799 = vmatprep.mubr.f32.mxu0 0.0
        %800 = vmatmul.mubr.f32.gmra.mrb[0].mxu0 %v674
        %v801 = vpop.f32.mrb[0].mxu0
        %v802 = vadd.f32 0.0, %v801
        %v803 = vpop.f32.mrb[0].mxu0
        %804 = vmatprep.mubr.f32.mxu0 0.0
        %805 = vmatmul.mubr.f32.gmra.mrb[0].mxu0 %v677
        %v806 = vpop.f32.mrb[0].mxu0
        %v807 = vadd.f32 0.0, %v806
        %v808 = vpop.f32.mrb[0].mxu0
        %809 = vmatprep.mubr.f32.mxu0 0.0
        %810 = vmatmul.mubr.f32.gmra.mrb[0].mxu0 %v680
        %v811 = vpop.f32.mrb[0].mxu0
        %v812 = vadd.f32 0.0, %v811
        %v813 = vpop.f32.mrb[0].mxu0
        %814 = vmatprep.mubr.f32.mxu0 0.0
        %815 = vmatmul.mubr.f32.gmra.mrb[0].mxu0 %v683
        %v816 = vpop.f32.mrb[0].mxu0
        %v817 = vadd.f32 0.0, %v816
        %v818 = vpop.f32.mrb[0].mxu0
        %819 = vmatprep.mubr.f32.mxu0 0.0
        %820 = vmatmul.mubr.f32.gmra.mrb[0].mxu0 %v686
        %v821 = vpop.f32.mrb[0].mxu0
        %v822 = vadd.f32 0.0, %v821
        %v823 = vpop.f32.mrb[0].mxu0
        %824 = vmatprep.mubr.f32.mxu0 0.0
        %825 = vmatmul.mubr.f32.gmra.mrb[0].mxu0 %v689
        %v826 = vpop.f32.mrb[0].mxu0
        %v827 = vadd.f32 0.0, %v826
        %v828 = vpop.f32.mrb[0].mxu0
        %829 = vmatprep.mubr.f32.mxu0 0.0
        %830 = vmatmul.mubr.f32.gmra.mrb[0].mxu0 %v692
        %v831 = vpop.f32.mrb[0].mxu0
        %v832 = vadd.f32 0.0, %v831
        %v833 = vpop.f32.mrb[0].mxu0
        %834 = vmatprep.mubr.f32.mxu0 0.0
        %835 = vmatmul.mubr.f32.gmra.mrb[0].mxu0 %v695
        %v836 = vpop.f32.mrb[0].mxu0
        %v837 = vadd.f32 0.0, %v836
        %v838 = vpop.f32.mrb[0].mxu0
        %839 = vmatprep.mubr.f32.mxu0 0.0
        %840 = vmatmul.mubr.f32.gmra.mrb[0].mxu0 %v698
        %v841 = vpop.f32.mrb[0].mxu0
        %v842 = vadd.f32 0.0, %v841
        %v843 = vpop.f32.mrb[0].mxu0
        %844 = vmatprep.mubr.f32.mxu0 0.0
        %845 = vmatmul.mubr.f32.gmra.mrb[0].mxu0 %v701
        %v846 = vpop.f32.mrb[0].mxu0
        %v847 = vadd.f32 0.0, %v846
        %v848 = vpop.f32.mrb[0].mxu0
        %849 = vmatprep.mubr.f32.mxu0 0.0
        %850 = vmatmul.mubr.f32.gmra.mrb[0].mxu0 %v704
        %v851 = vpop.f32.mrb[0].mxu0
        %v852 = vadd.f32 0.0, %v851
        %v853 = vpop.f32.mrb[0].mxu0
        %854 = vdwg.mxu0
        %v855 = vmul.f32 %v386, %v777
        %v856 = vmul.f32 %v392, %v782
        %v857 = vmul.f32 %v398, %v787
        %v858 = vmul.f32 %v404, %v792
        %v859 = vmul.f32 %v410, %v797
        %v860 = vmul.f32 %v416, %v802
        %v861 = vmul.f32 %v422, %v807
        %v862 = vmul.f32 %v428, %v812
        %v863 = vmul.f32 %v434, %v817
        %v864 = vmul.f32 %v440, %v822
        %v865 = vmul.f32 %v446, %v827
        %v866 = vmul.f32 %v452, %v832
        %v867 = vmul.f32 %v458, %v837
        %v868 = vmul.f32 %v464, %v842
        %v869 = vmul.f32 %v470, %v847
        %v870 = vmul.f32 %v476, %v852
        %v871 = vld [vmem:[%s4] sm:$0xff]
        %v872 = vld [vmem:[%s4 + $0x8] sm:$0xff]
        %v873 = vld [vmem:[%s4 + $0x10] sm:$0xff]
        %v874 = vld [vmem:[%s4 + $0x18] sm:$0xff]
        %v875 = vld [vmem:[%s4 + $0x20] sm:$0xff]
        %v876 = vld [vmem:[%s4 + $0x28] sm:$0xff]
        %v877 = vld [vmem:[%s4 + $0x30] sm:$0xff]
        %v878 = vld [vmem:[%s4 + $0x38] sm:$0xff]
        %v879 = vld [vmem:[%s4 + $0x40] sm:$0xff]
        %v880 = vld [vmem:[%s4 + $0x48] sm:$0xff]
        %v881 = vld [vmem:[%s4 + $0x50] sm:$0xff]
        %v882 = vld [vmem:[%s4 + $0x58] sm:$0xff]
        %v883 = vld [vmem:[%s4 + $0x60] sm:$0xff]
        %v884 = vld [vmem:[%s4 + $0x68] sm:$0xff]
        %v885 = vld [vmem:[%s4 + $0x70] sm:$0xff]
        %v886 = vld [vmem:[%s4 + $0x78] sm:$0xff]
        %887 = vmatprep.subr.mxu0 0.0
        %888 = vmatpush1.msra.mxu0 %v871
        %889 = vmatprep.subr.mxu0 0.0
        %890 = vmatpush1.msra.mxu0 %v872
        %891 = vmatprep.subr.mxu0 0.0
        %892 = vmatpush1.msra.mxu0 %v873
        %893 = vmatprep.subr.mxu0 0.0
        %894 = vmatpush1.msra.mxu0 %v874
        %895 = vmatprep.subr.mxu0 0.0
        %896 = vmatpush1.msra.mxu0 %v875
        %897 = vmatprep.subr.mxu0 0.0
        %898 = vmatpush1.msra.mxu0 %v876
        %899 = vmatprep.subr.mxu0 0.0
        %900 = vmatpush1.msra.mxu0 %v877
        %901 = vmatprep.subr.mxu0 0.0
        %902 = vmatpush1.msra.mxu0 %v878
        %903 = vmatprep.subr.mxu0 0.0
        %904 = vmatpush1.msra.mxu0 %v879
        %905 = vmatprep.subr.mxu0 0.0
        %906 = vmatpush1.msra.mxu0 %v880
        %907 = vmatprep.subr.mxu0 0.0
        %908 = vmatpush1.msra.mxu0 %v881
        %909 = vmatprep.subr.mxu0 0.0
        %910 = vmatpush1.msra.mxu0 %v882
        %911 = vmatprep.subr.mxu0 0.0
        %912 = vmatpush1.msra.mxu0 %v883
        %913 = vmatprep.subr.mxu0 0.0
        %914 = vmatpush1.msra.mxu0 %v884
        %915 = vmatprep.subr.mxu0 0.0
        %916 = vmatpush1.msra.mxu0 %v885
        %917 = vmatprep.subr.mxu0 0.0
        %918 = vmatpush1.msra.mxu0 %v886
        %919 = vmatprep.subr.mxu0 0.0
        %920 = vmatpush1.msra.mxu0 0.0
        %921 = vmatprep.subr.mxu0 0.0
        %922 = vmatpush1.msra.mxu0 0.0
        %923 = vmatprep.subr.mxu0 0.0
        %924 = vmatpush1.msra.mxu0 0.0
        %925 = vmatprep.subr.mxu0 0.0
        %926 = vmatpush1.msra.mxu0 0.0
        %927 = vmatprep.subr.mxu0 0.0
        %928 = vmatpush1.msra.mxu0 0.0
        %929 = vmatprep.subr.mxu0 0.0
        %930 = vmatpush1.msra.mxu0 0.0
        %931 = vmatprep.subr.mxu0 0.0
        %932 = vmatpush1.msra.mxu0 0.0
        %933 = vmatprep.subr.mxu0 0.0
        %934 = vmatpush1.msra.mxu0 0.0
        %935 = vmatprep.subr.mxu0 0.0
        %936 = vmatpush1.msra.mxu0 0.0
        %937 = vmatprep.subr.mxu0 0.0
        %938 = vmatpush1.msra.mxu0 0.0
        %939 = vmatprep.subr.mxu0 0.0
        %940 = vmatpush1.msra.mxu0 0.0
        %941 = vmatprep.subr.mxu0 0.0
        %942 = vmatpush1.msra.mxu0 0.0
        %943 = vmatprep.subr.mxu0 0.0
        %944 = vmatpush1.msra.mxu0 0.0
        %945 = vmatprep.subr.mxu0 0.0
        %946 = vmatpush1.msra.mxu0 0.0
        %947 = vmatprep.subr.mxu0 0.0
        %948 = vmatpush1.msra.mxu0 0.0
        %949 = vmatprep.subr.mxu0 0.0
        %950 = vmatpush1.msra.mxu0 0.0
        %951 = vmatprep.mubr.f32.mxu0 0.0
        %952 = vmatmul.mubr.f32.gmra.mrb[0].mxu0 %v855
        %v953 = vpop.f32.mrb[0].mxu0
        %v954 = vadd.f32 0.0, %v953
        %v955 = vpop.f32.mrb[0].mxu0
        %956 = vmatprep.mubr.f32.mxu0 0.0
        %957 = vmatmul.mubr.f32.gmra.mrb[0].mxu0 %v856
        %v958 = vpop.f32.mrb[0].mxu0
        %v959 = vadd.f32 0.0, %v958
        %v960 = vpop.f32.mrb[0].mxu0
        %961 = vmatprep.mubr.f32.mxu0 0.0
        %962 = vmatmul.mubr.f32.gmra.mrb[0].mxu0 %v857
        %v963 = vpop.f32.mrb[0].mxu0
        %v964 = vadd.f32 0.0, %v963
        %v965 = vpop.f32.mrb[0].mxu0
        %966 = vmatprep.mubr.f32.mxu0 0.0
        %967 = vmatmul.mubr.f32.gmra.mrb[0].mxu0 %v858
        %v968 = vpop.f32.mrb[0].mxu0
        %v969 = vadd.f32 0.0, %v968
        %v970 = vpop.f32.mrb[0].mxu0
        %971 = vmatprep.mubr.f32.mxu0 0.0
        %972 = vmatmul.mubr.f32.gmra.mrb[0].mxu0 %v859
        %v973 = vpop.f32.mrb[0].mxu0
        %v974 = vadd.f32 0.0, %v973
        %v975 = vpop.f32.mrb[0].mxu0
        %976 = vmatprep.mubr.f32.mxu0 0.0
        %977 = vmatmul.mubr.f32.gmra.mrb[0].mxu0 %v860
        %v978 = vpop.f32.mrb[0].mxu0
        %v979 = vadd.f32 0.0, %v978
        %v980 = vpop.f32.mrb[0].mxu0
        %981 = vmatprep.mubr.f32.mxu0 0.0
        %982 = vmatmul.mubr.f32.gmra.mrb[0].mxu0 %v861
        %v983 = vpop.f32.mrb[0].mxu0
        %v984 = vadd.f32 0.0, %v983
        %v985 = vpop.f32.mrb[0].mxu0
        %986 = vmatprep.mubr.f32.mxu0 0.0
        %987 = vmatmul.mubr.f32.gmra.mrb[0].mxu0 %v862
        %v988 = vpop.f32.mrb[0].mxu0
        %v989 = vadd.f32 0.0, %v988
        %v990 = vpop.f32.mrb[0].mxu0
        %991 = vmatprep.mubr.f32.mxu0 0.0
        %992 = vmatmul.mubr.f32.gmra.mrb[0].mxu0 %v863
        %v993 = vpop.f32.mrb[0].mxu0
        %v994 = vadd.f32 0.0, %v993
        %v995 = vpop.f32.mrb[0].mxu0
        %996 = vmatprep.mubr.f32.mxu0 0.0
        %997 = vmatmul.mubr.f32.gmra.mrb[0].mxu0 %v864
        %v998 = vpop.f32.mrb[0].mxu0
        %v999 = vadd.f32 0.0, %v998
        %v1000 = vpop.f32.mrb[0].mxu0
        %1001 = vmatprep.mubr.f32.mxu0 0.0
        %1002 = vmatmul.mubr.f32.gmra.mrb[0].mxu0 %v865
        %v1003 = vpop.f32.mrb[0].mxu0
        %v1004 = vadd.f32 0.0, %v1003
        %v1005 = vpop.f32.mrb[0].mxu0
        %1006 = vmatprep.mubr.f32.mxu0 0.0
        %1007 = vmatmul.mubr.f32.gmra.mrb[0].mxu0 %v866
        %v1008 = vpop.f32.mrb[0].mxu0
        %v1009 = vadd.f32 0.0, %v1008
        %v1010 = vpop.f32.mrb[0].mxu0
        %1011 = vmatprep.mubr.f32.mxu0 0.0
        %1012 = vmatmul.mubr.f32.gmra.mrb[0].mxu0 %v867
        %v1013 = vpop.f32.mrb[0].mxu0
        %v1014 = vadd.f32 0.0, %v1013
        %v1015 = vpop.f32.mrb[0].mxu0
        %1016 = vmatprep.mubr.f32.mxu0 0.0
        %1017 = vmatmul.mubr.f32.gmra.mrb[0].mxu0 %v868
        %v1018 = vpop.f32.mrb[0].mxu0
        %v1019 = vadd.f32 0.0, %v1018
        %v1020 = vpop.f32.mrb[0].mxu0
        %1021 = vmatprep.mubr.f32.mxu0 0.0
        %1022 = vmatmul.mubr.f32.gmra.mrb[0].mxu0 %v869
        %v1023 = vpop.f32.mrb[0].mxu0
        %v1024 = vadd.f32 0.0, %v1023
        %v1025 = vpop.f32.mrb[0].mxu0
        %1026 = vmatprep.mubr.f32.mxu0 0.0
        %1027 = vmatmul.mubr.f32.gmra.mrb[0].mxu0 %v870
        %v1028 = vpop.f32.mrb[0].mxu0
        %v1029 = vadd.f32 0.0, %v1028
        %v1030 = vpop.f32.mrb[0].mxu0
        %1031 = vdwg.mxu0
        %1032 = vst [vmem:[%s218] sm:$0xff] %v954
        %1033 = vst [vmem:[%s218 + $0x8] sm:$0xff] %v959
        %1034 = vst [vmem:[%s218 + $0x10] sm:$0xff] %v964
        %1035 = vst [vmem:[%s218 + $0x18] sm:$0xff] %v969
        %1036 = vst [vmem:[%s218 + $0x20] sm:$0xff] %v974
        %1037 = vst [vmem:[%s218 + $0x28] sm:$0xff] %v979
        %1038 = vst [vmem:[%s218 + $0x30] sm:$0xff] %v984
        %1039 = vst [vmem:[%s218 + $0x38] sm:$0xff] %v989
        %1040 = vst [vmem:[%s218 + $0x40] sm:$0xff] %v994
        %1041 = vst [vmem:[%s218 + $0x48] sm:$0xff] %v999
        %1042 = vst [vmem:[%s218 + $0x50] sm:$0xff] %v1004
        %1043 = vst [vmem:[%s218 + $0x58] sm:$0xff] %v1009
        %1044 = vst [vmem:[%s218 + $0x60] sm:$0xff] %v1014
        %1045 = vst [vmem:[%s218 + $0x68] sm:$0xff] %v1019
        %1046 = vst [vmem:[%s218 + $0x70] sm:$0xff] %v1024
        %1047 = vst [vmem:[%s218 + $0x78] sm:$0xff] %v1029
        %s1048 = sand.u32 %s137, 1
        %s1049 = scalar_lea.sflag [#allocation3], %s1048
        %s1050 = sand.u32 %s137, 1
        %s1051 = smul.addr %s1050, 128
        %s1052 = scalar_lea.vmem [#allocation2], %s1051
        // Predicated region
        $region41: #{tpu_custom_call.1} parent=39 // pred_check
          %p1053 = pneg %p147
        $region42: #{tpu_custom_call.1} parent=39 // pred_check_branch
          %1055 = sbr.rel (%p1053) target = $region44
        $region43: #{tpu_custom_call.1} parent=39 // pred_region
          %s1056 = smul.u32 16, %s19
          %s1058 = ssub.s32 2048, 2048
          %1059 = vsyncadd %s1049, %s1058
          %s1060 = smul.addr %s1056, 128
          %s1061 = scalar_lea.hbm %s5, %s1060
          %s1062 = sshll.u32 %s1052, 4
          %s1063 = int_to_ptr.vmem [resolvable:$true] %s1062
          %1068 = dma.vmem_to_hbm [thread:$0]  %s1063, 2048, %s1061, %s1049, 128, 128, 8
        $region44: #{tpu_custom_call.1} parent=39 // pred_fallthru
          _
      $region40: #{tpu_custom_call.1} parent=5 // pred_fallthru
        _
      %p1069 = scmp.le.s32.totalorder 2, %s14
      // Predicated region
      $region45: #{tpu_custom_call.1} parent=5 // pred_check
        %p1070 = pneg %p1069
      $region46: #{tpu_custom_call.1} parent=5 // pred_check_branch
        %1072 = sbr.rel (%p1070) target = $region48
      $region47: #{tpu_custom_call.1} parent=5 // pred_region
        %s1073 = ssub.s32 %s14, 2
        // Predicated region
        $region49: #{tpu_custom_call.1} parent=47 // pred_check
          %p1074 = pneg %p153
        $region50: #{tpu_custom_call.1} parent=47 // pred_check_branch
          %1076 = sbr.rel (%p1074) target = $region52
        $region51: #{tpu_custom_call.1} parent=47 // pred_region
          %s1077 = sand.u32 %s138, 1
          %s1078 = scalar_lea.sflag [#allocation3], %s1077
          %s1079 = sand.u32 %s138, 1
          %s1080 = smul.addr %s1079, 128
          %s1081 = scalar_lea.vmem [#allocation2], %s1080
          %1082 = dma.done %s1078, 2048
        $region52: #{tpu_custom_call.1} parent=47 // pred_fallthru
          _
      $region48: #{tpu_custom_call.1} parent=5 // pred_fallthru
        _
    $region6: #{tpu_custom_call.1} parent=1 // loop_footer
      %s18 = sadd.s32 1, %s14
    $region7: #{tpu_custom_call.1} parent=1 // loop_footer_branch
      %13 = sbr.rel target = $region3
    $region8: #{tpu_custom_call.1} parent=1 // loop_exit
      _
    %1083 = vsyncpa [#allocation3], 1
    %s1084 = scalar_lea.sflag [#allocation3], 1
    %1085 = vsyncpa %s1084, 1

</llo_original>
